<compile_context>
chip_gen: v7x
topology: tpu7x:2x2x1
jax: 0.10.0
libtpu: 0.0.40
codegen_flags: <defaults>
</compile_context>

<pallas_src>
import functools

import jax
import jax.numpy as jnp
from jax.experimental import pallas as pl
from jax.experimental.pallas import tpu as pltpu


# ----------------------------------------------------------------------------
# Fused kernel: tanh(x @ W + b) . v -> softmax over T -> weighted sum.
# Per grid step: tb batch elements (lstm slab is (tb*T, H)).
# ----------------------------------------------------------------------------
def _attention_kernel(tb, T, H, lstm_ref, w_att_ref, bv_ref, out_ref):
    lo = lstm_ref[...]                                         # (tb*T, H) f32

    # Linear + tanh: one MXU pass, bf16 operands, f32 accumulation.
    att = jnp.tanh(
        jnp.dot(lo.astype(jnp.bfloat16),
                w_att_ref[...].astype(jnp.bfloat16),
                preferred_element_type=jnp.float32)
        + bv_ref[0:1, :]                                       # bias row, f32
    )                                                          # (tb*T, H) f32

    # Leading-dim split (tb*T,H)->(tb,T,H): layout-preserving, no relayout.
    att3 = att.reshape(tb, T, H)
    lo3 = lo.reshape(tb, T, H)
    v3 = bv_ref[1:2, :].reshape(1, 1, H)                       # v row

    # scores = att . v : VPU multiply + XLU lane reduce (no N=1 MXU matmul).
    scores = jnp.sum(att3 * v3, axis=-1)                       # (tb, T)

    # Softmax over time; EUP approx reciprocal for the normalization.
    m = jnp.max(scores, axis=-1, keepdims=True)
    e = jnp.exp(scores - m)
    w = e * pl.reciprocal(jnp.sum(e, axis=-1, keepdims=True), approx=True)

    # context = sum_t w * lstm_output  (cheap sublane reduce at T=8).
    ctx = jnp.sum(w[:, :, None] * lo3, axis=1)                 # (tb, H)

    # Single coalesced output slab: [weights | context].
    out_ref[0, :, 0:T] = w
    out_ref[0, :, T:T + H] = ctx


@jax.jit
def attention_forward(lstm_output, w_att, b_att, v):
    """lstm_output: (B, T, H); w_att: (H, H); b_att: (H,); v: (H,)."""
    B, T, H = lstm_output.shape
    # Two batch blocks when cleanly splittable (feeds both v7x TensorCores);
    # otherwise a single full-extent block (always legal).
    nb = 2 if (B % 2 == 0 and ((B // 2) * T) % 8 == 0) else 1
    tb = B // nb

    # Flatten in the wrapper (free in XLA) so the kernel sees a 2D slab.
    lstm_flat = lstm_output.reshape(B * T, H).astype(jnp.float32)
    bv = jnp.stack([b_att, v]).astype(jnp.float32)             # (2, H): bias, v

    out = pl.pallas_call(
        functools.partial(_attention_kernel, tb, T, H),
        out_shape=jax.ShapeDtypeStruct((nb, tb, T + H), jnp.float32),
        grid=(nb,),
        in_specs=[
            pl.BlockSpec((tb * T, H), lambda i: (i, 0)),       # per-block lstm slab
            pl.BlockSpec((H, H), lambda i: (0, 0)),            # weights, resident
            pl.BlockSpec((2, H), lambda i: (0, 0)),            # [bias; v], resident
        ],
        out_specs=pl.BlockSpec((1, tb, T + H), lambda i: (i, 0, 0)),
        compiler_params=pltpu.CompilerParams(
            dimension_semantics=("parallel",),                 # shard batch on v7x
            vmem_limit_bytes=32 * 1024 * 1024,
        ),
    )(lstm_flat, w_att.astype(jnp.float32), bv)

    out = out.reshape(B, T + H)
    attn_w = out[:, :T]                                        # (B, T)
    ctx = out[:, T:]                                           # (B, H)
    # Match PyTorch: weights returned as (B, T, 1).
    return ctx, attn_w[:, :, None]


# ----------------------------------------------------------------------------
# Pure-JAX reference (mirrors the PyTorch module exactly).
# ----------------------------------------------------------------------------
def attention_ref(lstm_output, w_att, b_att, v):
    att = jnp.tanh(lstm_output @ w_att + b_att)                # (B, T, H)
    scores = jnp.einsum("bth,h->bt", att, v)                   # (B, T)
    w = jax.nn.softmax(scores, axis=1)                         # softmax over T
    ctx = jnp.sum(w[:, :, None] * lstm_output, axis=1)         # (B, H)
    return ctx, w[:, :, None]


# ----------------------------------------------------------------------------
if __name__ == "__main__":
    B, T, H = 4, 8, 32

    key = jax.random.PRNGKey(0)
    kx, kw, kb, kv = jax.random.split(key, 4)
    lstm_output = jax.random.normal(kx, (B, T, H), jnp.float32)
    w_att = 0.1 * jax.random.normal(kw, (H, H), jnp.float32)   # Linear weight
    b_att = 0.1 * jax.random.normal(kb, (H,), jnp.float32)     # Linear bias
    v = 0.1 * jax.random.normal(kv, (H,), jnp.float32)         # attention vector

    ctx, attn_w = attention_forward(lstm_output, w_att, b_att, v)
    ctx = jax.block_until_ready(ctx)
    attn_w = jax.block_until_ready(attn_w)

    ctx_r, attn_r = attention_ref(lstm_output, w_att, b_att, v)

    assert ctx.shape == (B, H) and attn_w.shape == (B, T, 1)
    assert jnp.allclose(ctx, ctx_r, atol=2e-3, rtol=2e-3), "context mismatch"
    assert jnp.allclose(attn_w, attn_r, atol=2e-3, rtol=2e-3), "attn weights mismatch"

    print("KERNEL_OK")
</pallas_src>

<mosaic_0001>
module attributes {stable_mosaic.version = 11 : i64} {
  func.func @_attention_kernel(%arg0: i32, %arg1: memref<16x32xf32, #tpu.memory_space<vmem>>, %arg2: memref<32x32xf32, #tpu.memory_space<vmem>>, %arg3: memref<2x32xf32, #tpu.memory_space<vmem>>, %arg4: memref<1x2x40xf32, #tpu.memory_space<vmem>>) attributes {dimension_semantics = [#tpu.dimension_semantics<parallel>], iteration_bounds = array<i64: 2>, scalar_prefetch = 0 : i64, scratch_operands = 0 : i64, tpu.core_type = #tpu.core_type<tc>, window_params = [{transform_indices = @transform_0, window_bounds = array<i64: 16, 32>}, {pipeline_mode = #tpu.pipeline_mode<synchronous>, transform_indices = @transform_1, window_bounds = array<i64: 32, 32>}, {pipeline_mode = #tpu.pipeline_mode<synchronous>, transform_indices = @transform_2, window_bounds = array<i64: 2, 32>}, {transform_indices = @transform_3, window_bounds = array<i64: 1, 2, 40>}]} {
    %c0 = arith.constant 0 : index
    %c0_0 = arith.constant 0 : index
    %0 = vector.load %arg1[%c0, %c0_0] : memref<16x32xf32, #tpu.memory_space<vmem>>, vector<16x32xf32>
    %1 = arith.truncf %0 : vector<16x32xf32> to vector<16x32xbf16>
    %c0_1 = arith.constant 0 : index
    %c0_2 = arith.constant 0 : index
    %2 = vector.load %arg2[%c0_1, %c0_2] : memref<32x32xf32, #tpu.memory_space<vmem>>, vector<32x32xf32>
    %3 = arith.truncf %2 : vector<32x32xf32> to vector<32x32xbf16>
    %cst = arith.constant dense<0.000000e+00> : vector<16x32xf32>
    %4 = tpu.matmul %1, %3, %cst {dimension_numbers = #tpu.dot_dimension_numbers<[1], [0], [0], [1], [0, 0, 1, 1], [], []>} : vector<16x32xbf16>, vector<32x32xbf16>, vector<16x32xf32> -> vector<16x32xf32>
    %c0_3 = arith.constant 0 : index
    %c0_4 = arith.constant 0 : index
    %5 = vector.load %arg3[%c0_3, %c0_4] : memref<2x32xf32, #tpu.memory_space<vmem>>, vector<1x32xf32>
    %6 = vector.broadcast %5 : vector<1x32xf32> to vector<16x32xf32>
    %7 = arith.addf %4, %6 : vector<16x32xf32>
    %8 = math.tanh %7 : vector<16x32xf32>
    %9 = vector.shape_cast %8 : vector<16x32xf32> to vector<2x8x32xf32>
    %10 = vector.shape_cast %0 : vector<16x32xf32> to vector<2x8x32xf32>
    %c1 = arith.constant 1 : index
    %c0_5 = arith.constant 0 : index
    %11 = vector.load %arg3[%c1, %c0_5] : memref<2x32xf32, #tpu.memory_space<vmem>>, vector<1x32xf32>
    %12 = vector.shape_cast %11 : vector<1x32xf32> to vector<1x1x32xf32>
    %13 = vector.broadcast %12 : vector<1x1x32xf32> to vector<2x8x32xf32>
    %14 = arith.mulf %9, %13 : vector<2x8x32xf32>
    %cst_6 = arith.constant dense<0.000000e+00> : vector<2x8xf32>
    %15 = vector.multi_reduction <add>, %14, %cst_6 [2] : vector<2x8x32xf32> to vector<2x8xf32>
    %cst_7 = arith.constant dense<0xFF800000> : vector<2xf32>
    %16 = vector.multi_reduction <maximumf>, %15, %cst_7 [1] : vector<2x8xf32> to vector<2xf32>
    %17 = vector.shape_cast %16 : vector<2xf32> to vector<2x1xf32>
    %18 = vector.broadcast %17 : vector<2x1xf32> to vector<2x8xf32>
    %19 = arith.subf %15, %18 : vector<2x8xf32>
    %20 = math.exp %19 : vector<2x8xf32>
    %cst_8 = arith.constant dense<0.000000e+00> : vector<2xf32>
    %21 = vector.multi_reduction <add>, %20, %cst_8 [1] : vector<2x8xf32> to vector<2xf32>
    %22 = vector.shape_cast %21 : vector<2xf32> to vector<2x1xf32>
    %23 = tpu.reciprocal %22 {approx = true} : vector<2x1xf32> -> vector<2x1xf32>
    %24 = vector.broadcast %23 : vector<2x1xf32> to vector<2x8xf32>
    %25 = arith.mulf %20, %24 : vector<2x8xf32>
    %26 = vector.shape_cast %25 : vector<2x8xf32> to vector<2x8x1xf32>
    %27 = vector.broadcast %26 : vector<2x8x1xf32> to vector<2x8x32xf32>
    %28 = arith.mulf %27, %10 : vector<2x8x32xf32>
    %cst_9 = arith.constant dense<0.000000e+00> : vector<2x32xf32>
    %29 = vector.multi_reduction <add>, %28, %cst_9 [1] : vector<2x8x32xf32> to vector<2x32xf32>
    %c0_10 = arith.constant 0 : index
    %c0_11 = arith.constant 0 : index
    %c0_12 = arith.constant 0 : index
    %30 = vector.load %arg4[%c0_10, %c0_11, %c0_12] : memref<1x2x40xf32, #tpu.memory_space<vmem>>, vector<1x2x8xf32>
    %31 = vector.shape_cast %30 : vector<1x2x8xf32> to vector<2x8xf32>
    %32 = vector.shape_cast %25 : vector<2x8xf32> to vector<1x2x8xf32>
    tpu.vector_store %arg4[%c0_10, %c0_11, %c0_12], %32 {strides = array<i32>} : memref<1x2x40xf32, #tpu.memory_space<vmem>>, vector<1x2x8xf32>,
    %c0_13 = arith.constant 0 : index
    %c0_14 = arith.constant 0 : index
    %c8 = arith.constant 8 : index
    %33 = vector.load %arg4[%c0_13, %c0_14, %c8] : memref<1x2x40xf32, #tpu.memory_space<vmem>>, vector<1x2x32xf32>
    %34 = vector.shape_cast %33 : vector<1x2x32xf32> to vector<2x32xf32>
    %35 = vector.shape_cast %29 : vector<2x32xf32> to vector<1x2x32xf32>
    tpu.vector_store %arg4[%c0_13, %c0_14, %c8], %35 {strides = array<i32>} : memref<1x2x40xf32, #tpu.memory_space<vmem>>, vector<1x2x32xf32>,
    return
  }
  func.func @transform_0(%arg0: i32) -> (i32, i32) {
    %c0_i32 = arith.constant 0 : i32
    %c0_i32_0 = arith.constant 0 : i32
    return %arg0, %c0_i32 : i32, i32
  }
  func.func @transform_1(%arg0: i32) -> (i32, i32) {
    %c0_i32 = arith.constant 0 : i32
    %c0_i32_0 = arith.constant 0 : i32
    %c0_i32_1 = arith.constant 0 : i32
    return %c0_i32, %c0_i32_0 : i32, i32
  }
  func.func @transform_2(%arg0: i32) -> (i32, i32) {
    %c0_i32 = arith.constant 0 : i32
    %c0_i32_0 = arith.constant 0 : i32
    %c0_i32_1 = arith.constant 0 : i32
    return %c0_i32, %c0_i32_0 : i32, i32
  }
  func.func @transform_3(%arg0: i32) -> (i32, i32, i32) {
    %c0_i32 = arith.constant 0 : i32
    %c0_i32_0 = arith.constant 0 : i32
    %c0_i32_1 = arith.constant 0 : i32
    return %arg0, %c0_i32, %c0_i32_0 : i32, i32, i32
  }
}

</mosaic_0001>

<llo_original>
// kernel: attention_forward.1
$region0: #{attention_forward.1}
  #allocation0 [shape = 'u32[]', space=smem, size = 0x4, offset = 0x4, fixed_abs, tag = 'smem constant byte address 0x4 - core index']
  #allocation1 [shape = 'u32[144,128]{1,0:T(1,128)}', space=vmem, size = 0x12000, scoped, tag = 'internal scratch']
  %s0 = inlined_call_operand.hbm [shape: f32[32,32], index: 0, kind: input, shape index: {}]
  %s1 = inlined_call_operand.hbm [shape: f32[32,32], index: 1, kind: input, shape index: {}]
  %s2 = inlined_call_operand.vmem [shape: f32[2,32], index: 2, kind: input, shape index: {}]
  %s3 = inlined_call_operand.vmem [shape: f32[2,2,40], index: 3, kind: output, shape index: {}]
  %s4 = sld [smem:[#allocation0]]
  $region53: #{attention_forward.1} parent=0
    _
  %s6 = ssub.s32 1, %s4
  %s7 = scalar_select 0, %s6, %s4
  $region1: #{attention_forward.1} parent=0
    #allocation2 [shape = 'u8[16384]{0}', space=vmem, size = 0x4000, scoped, tag = 'input window, operand 0']
    #allocation3 [shape = 's32[2]{0}', space=sflag, size = 0x8, scoped, tag = 'scoped memory for attention_forward.1']
    #allocation4 [shape = 'u8[16384]{0}', space=vmem, size = 0x4000, scoped, tag = 'input window, operand 1, single buffered']
    #allocation5 [shape = 's32[1]{0}', space=sflag, size = 0x4, scoped, tag = 'scoped memory for attention_forward.1']
    %8 = vsyncpa [#allocation3], 0
    %s9 = scalar_lea.sflag [#allocation3], 1
    %10 = vsyncpa %s9, 0
    %11 = vsyncpa [#allocation5], 0
    loop: start=0, step=1, limit=4
    $region2: #{attention_forward.1} parent=1 // loop_pre_header
      _
    $region3: #{attention_forward.1} parent=1 // loop_header
      %s13 = sphi 0, %s17
      %p14 = scmp.ge.s32.totalorder %s13, 4
      %s23 = sphi 0, %s25
      %s26 = sphi 0, %s23
      %s27 = sphi 0, %s26
      %s43 = sphi 0, %s27
      %s47 = sphi 0, %s47
      %s49 = sphi 0, %s47
      %s50 = sphi 0, %s49
      %s64 = sphi 0, %s50
      %s68 = sphi 0, %s68
      %s70 = sphi 0, %s68
      %s71 = sphi 0, %s70
      %s85 = sphi 0, %s71
      %s91 = sphi 0, %s93
      %s94 = sphi 0, %s91
      %s95 = sphi 0, %s94
      %s111 = sphi 0, %s95
    $region4: #{attention_forward.1} parent=1 // loop_header_branch
      %16 = sbr.rel (%p14) target = $region8
    $region5: #{attention_forward.1} parent=1 // loop_body
      %s18 = ssub.s32 %s13, 1
      %s19 = ssub.s32 %s13, 2
      %s20 = sadd.s32 %s13, 1
      %s21 = ssub.s32 %s13, %s20
      %p22 = scmp.eq.s32.totalorder %s21, 0
      %s24 = sadd.s32 %s23, 1
      %s25 = scalar_select %p22, %s23, %s24
      %p28 = pneg %p22
      %p29 = scmp.eq.s32.totalorder %s13, 1
      %p30 = por %p28, %p29
      %p31 = scmp.ne.s32.totalorder %s23, %s26
      %p32 = scmp.eq.s32.totalorder %s13, 0
      %p33 = por %p31, %p32
      %p34 = scmp.ne.s32.totalorder %s23, %s26
      %p35 = scmp.eq.s32.totalorder %s18, 1
      %p36 = por %p34, %p35
      %p37 = scmp.ne.s32.totalorder %s26, %s27
      %p38 = scmp.eq.s32.totalorder %s18, 0
      %p39 = por %p37, %p38
      %p40 = scmp.ne.s32.totalorder %s26, %s27
      %p41 = scmp.eq.s32.totalorder %s19, 1
      %p42 = por %p40, %p41
      %p44 = scmp.ne.s32.totalorder %s27, %s43
      %p45 = scmp.eq.s32.totalorder %s19, 0
      %p46 = por %p44, %p45
      %s48 = sadd.s32 %s47, 1
      %p51 = scmp.eq.s32.totalorder %s13, 1
      %p52 = scmp.ne.s32.totalorder %s47, %s49
      %p53 = scmp.eq.s32.totalorder %s13, 0
      %p54 = por %p52, %p53
      %p55 = scmp.ne.s32.totalorder %s47, %s49
      %p56 = scmp.eq.s32.totalorder %s18, 1
      %p57 = por %p55, %p56
      %p58 = scmp.ne.s32.totalorder %s49, %s50
      %p59 = scmp.eq.s32.totalorder %s18, 0
      %p60 = por %p58, %p59
      %p61 = scmp.ne.s32.totalorder %s49, %s50
      %p62 = scmp.eq.s32.totalorder %s19, 1
      %p63 = por %p61, %p62
      %p65 = scmp.ne.s32.totalorder %s50, %s64
      %p66 = scmp.eq.s32.totalorder %s19, 0
      %p67 = por %p65, %p66
      %s69 = sadd.s32 %s68, 1
      %p72 = scmp.eq.s32.totalorder %s13, 1
      %p73 = scmp.ne.s32.totalorder %s68, %s70
      %p74 = scmp.eq.s32.totalorder %s13, 0
      %p75 = por %p73, %p74
      %p76 = scmp.ne.s32.totalorder %s68, %s70
      %p77 = scmp.eq.s32.totalorder %s18, 1
      %p78 = por %p76, %p77
      %p79 = scmp.ne.s32.totalorder %s70, %s71
      %p80 = scmp.eq.s32.totalorder %s18, 0
      %p81 = por %p79, %p80
      %p82 = scmp.ne.s32.totalorder %s70, %s71
      %p83 = scmp.eq.s32.totalorder %s19, 1
      %p84 = por %p82, %p83
      %p86 = scmp.ne.s32.totalorder %s71, %s85
      %p87 = scmp.eq.s32.totalorder %s19, 0
      %p88 = por %p86, %p87
      %s89 = ssub.s32 %s13, %s20
      %p90 = scmp.eq.s32.totalorder %s89, 0
      %s92 = sadd.s32 %s91, 1
      %s93 = scalar_select %p90, %s91, %s92
      %p96 = pneg %p90
      %p97 = scmp.eq.s32.totalorder %s13, 1
      %p98 = por %p96, %p97
      %p99 = scmp.ne.s32.totalorder %s91, %s94
      %p100 = scmp.eq.s32.totalorder %s13, 0
      %p101 = por %p99, %p100
      %p102 = scmp.ne.s32.totalorder %s91, %s94
      %p103 = scmp.eq.s32.totalorder %s18, 1
      %p104 = por %p102, %p103
      %p105 = scmp.ne.s32.totalorder %s94, %s95
      %p106 = scmp.eq.s32.totalorder %s18, 0
      %p107 = por %p105, %p106
      %p108 = scmp.ne.s32.totalorder %s94, %s95
      %p109 = scmp.eq.s32.totalorder %s19, 1
      %p110 = por %p108, %p109
      %p112 = scmp.ne.s32.totalorder %s95, %s111
      %p113 = scmp.eq.s32.totalorder %s19, 0
      %p114 = por %p112, %p113
      %p115 = scmp.le.s32.totalorder 1, %s13
      %p116 = scmp.lt.s32.totalorder %s13, 3
      %p117 = pnand %p115, %p116
      %p118 = pneg %p117
      // Predicated region
      $region9: #{attention_forward.1} parent=5 // pred_check
        _
      $region10: #{attention_forward.1} parent=5 // pred_check_branch
        %120 = sbr.rel (%p117) target = $region12
      $region11: #{attention_forward.1} parent=5 // pred_region
        %s121 = ssub.s32 %s13, 1
        // Predicated region
        $region13: #{attention_forward.1} parent=11 // pred_check
          %p122 = pneg %p60
        $region14: #{attention_forward.1} parent=11 // pred_check_branch
          %124 = sbr.rel (%p122) target = $region16
        $region15: #{attention_forward.1} parent=11 // pred_region
          %s126 = ssub.s32 512, 512
          %127 = vsyncadd [#allocation5], %s126
          %s128 = sshll.u32 [#allocation4], 4
          %s129 = int_to_ptr.vmem [resolvable:$true] %s128
          %134 = dma.hbm_to_vmem [thread:$0]  %s1, 512, %s129, [#allocation5], 128, 128, 8
        $region16: #{attention_forward.1} parent=11 // pred_fallthru
          _
        // Predicated region
        $region17: #{attention_forward.1} parent=11 // pred_check
          %p135 = pneg %p81
        $region18: #{attention_forward.1} parent=11 // pred_check_branch
          %137 = sbr.rel (%p135) target = $region20
        $region19: #{attention_forward.1} parent=11 // pred_region
          _
        $region20: #{attention_forward.1} parent=11 // pred_fallthru
          _
      $region12: #{attention_forward.1} parent=5 // pred_fallthru
        _
      %p138 = scmp.lt.s32.totalorder %s13, 2
      // Predicated region
      $region21: #{attention_forward.1} parent=5 // pred_check
        %p139 = pneg %p138
      $region22: #{attention_forward.1} parent=5 // pred_check_branch
        %141 = sbr.rel (%p139) target = $region24
      $region23: #{attention_forward.1} parent=5 // pred_region
        // Predicated region
        $region25: #{attention_forward.1} parent=23 // pred_check
          %p142 = pneg %p33
        $region26: #{attention_forward.1} parent=23 // pred_check_branch
          %144 = sbr.rel (%p142) target = $region28
        $region27: #{attention_forward.1} parent=23 // pred_region
          %s145 = sand.u32 %s23, 1
          %s146 = scalar_lea.sflag [#allocation3], %s145
          %s147 = sand.u32 %s23, 1
          %s148 = smul.addr %s147, 16
          %s149 = scalar_lea.vmem [#allocation2], %s148
          %s150 = smul.u32 2, %s13
          %s152 = ssub.s32 256, 256
          %153 = vsyncadd %s146, %s152
          %s154 = smul.addr %s150, 128
          %s155 = scalar_lea.hbm %s0, %s154
          %s156 = sshll.u32 %s149, 4
          %s157 = int_to_ptr.vmem [resolvable:$true] %s156
          %162 = dma.hbm_to_vmem [thread:$0]  %s155, 256, %s157, %s146, 128, 128, 8
        $region28: #{attention_forward.1} parent=23 // pred_fallthru
          _
      $region24: #{attention_forward.1} parent=5 // pred_fallthru
        _
      %p163 = scmp.le.s32.totalorder 1, %s13
      %p164 = scmp.lt.s32.totalorder %s13, 3
      %p165 = pnand %p163, %p164
      %p166 = pneg %p165
      // Predicated region
      $region29: #{attention_forward.1} parent=5 // pred_check
        _
      $region30: #{attention_forward.1} parent=5 // pred_check_branch
        %168 = sbr.rel (%p165) target = $region32
      $region31: #{attention_forward.1} parent=5 // pred_region
        %s169 = ssub.s32 %s13, 1
        %s170 = sand.u32 %s26, 1
        %s171 = scalar_lea.sflag [#allocation3], %s170
        %s172 = sand.u32 %s26, 1
        %s173 = smul.addr %s172, 16
        %s174 = scalar_lea.vmem [#allocation2], %s173
        // Predicated region
        $region33: #{attention_forward.1} parent=31 // pred_check
          %p175 = pneg %p39
        $region34: #{attention_forward.1} parent=31 // pred_check_branch
          %177 = sbr.rel (%p175) target = $region36
        $region35: #{attention_forward.1} parent=31 // pred_region
          %178 = dma.done %s171, 256
        $region36: #{attention_forward.1} parent=31 // pred_fallthru
          _
        // Predicated region
        $region37: #{attention_forward.1} parent=31 // pred_check
          %p179 = pneg %p60
        $region38: #{attention_forward.1} parent=31 // pred_check_branch
          %181 = sbr.rel (%p179) target = $region40
        $region39: #{attention_forward.1} parent=31 // pred_region
          %182 = dma.done [#allocation5], 512
        $region40: #{attention_forward.1} parent=31 // pred_fallthru
          _
        %s183 = sand.u32 %s26, 1
        %s184 = scalar_lea.sflag [#allocation3], %s183
        %s185 = sand.u32 %s26, 1
        %s186 = smul.addr %s185, 16
        %s187 = scalar_lea.vmem [#allocation2], %s186
        %p188 = pneg %p39
        %p189 = pneg %p36
        %p190 = pneg %p60
        %p191 = pneg %p57
        %p192 = pneg %p81
        %p193 = pneg %p78
        %p194 = pneg %p107
        %p195 = pneg %p104
        %p196 = scmp.lt.s32.totalorder %s18, 1
        %s197 = scalar_select %p196, %s18, 1
        %s198 = smul.addr %s197, 2
        %s199 = scalar_lea.vmem %s3, %s198
        %s200 = smul.u32 2, %s18
        %p201 = scmp.lt.s32.totalorder %s18, 1
        %s202 = scalar_select %p201, %s18, 1
        %s203 = smul.addr %s202, 2
        %s204 = scalar_lea.vmem %s3, %s203
        %v206 = vld [vmem:[%s174] sm:$0xff]
        %v207 = vld [vmem:[%s174 + $0x8] sm:$0xff]
        %v208 = vpack.c.bf16 %v207, %v206
        %v209 = vld [vmem:[#allocation4] sm:$0xff]
        %v210 = vld [vmem:[#allocation4 + $0x8] sm:$0xff]
        %v211 = vld [vmem:[#allocation4 + $0x10] sm:$0xff]
        %v212 = vld [vmem:[#allocation4 + $0x18] sm:$0xff]
        %v213 = vpack.c.bf16 %v210, %v209
        %v214 = vpack.c.bf16 %v212, %v211
        %v215 = vld [vmem:[%s2] sm:$0x1]
        %v216 = vlaneseq
        %v217 = vshrl.u32 %v216, 7
        %v218 = vsub.s32 0, %v217
        %v219 = vrot.slane %v215, %v218
        %vm220 = vcmask 261120
        %v222 = vsel %vm220, %v208, 0
        %224 = vmatprep.subr.bf16.mxu0 0
        %225 = vmatpush1.bf16.msra.mxu0 %v213
        %226 = vmatprep.subr.bf16.mxu0 0
        %227 = vmatpush1.bf16.msra.mxu0 %v214
        %228 = vmatprep.subr.bf16.mxu0 0
        %229 = vmatpush1.bf16.msra.mxu0 0
        %230 = vmatprep.subr.bf16.mxu0 0
        %231 = vmatpush1.bf16.msra.mxu0 0
        %232 = vmatprep.subr.bf16.mxu0 0
        %233 = vmatpush1.bf16.msra.mxu0 0
        %234 = vmatprep.subr.bf16.mxu0 0
        %235 = vmatpush1.bf16.msra.mxu0 0
        %236 = vmatprep.subr.bf16.mxu0 0
        %237 = vmatpush1.bf16.msra.mxu0 0
        %238 = vmatprep.subr.bf16.mxu0 0
        %239 = vmatpush1.bf16.msra.mxu0 0
        %240 = vmatprep.subr.bf16.mxu0 0
        %241 = vmatpush1.bf16.msra.mxu0 0
        %242 = vmatprep.subr.bf16.mxu0 0
        %243 = vmatpush1.bf16.msra.mxu0 0
        %244 = vmatprep.subr.bf16.mxu0 0
        %245 = vmatpush1.bf16.msra.mxu0 0
        %246 = vmatprep.subr.bf16.mxu0 0
        %247 = vmatpush1.bf16.msra.mxu0 0
        %248 = vmatprep.subr.bf16.mxu0 0
        %249 = vmatpush1.bf16.msra.mxu0 0
        %250 = vmatprep.subr.bf16.mxu0 0
        %251 = vmatpush1.bf16.msra.mxu0 0
        %252 = vmatprep.subr.bf16.mxu0 0
        %253 = vmatpush1.bf16.msra.mxu0 0
        %254 = vmatprep.subr.bf16.mxu0 0
        %255 = vmatpush1.bf16.msra.mxu0 0
        %256 = vmatprep.mubr.bf16.mxu0 0
        %257 = vmatmul.mubr.bf16.gmra.mrb[0].mxu0 %v222
        %v258 = vpop.f32.mrb[0].mxu0
        %v259 = vadd.f32 %v219, %v258
        %v260 = vpop.f32.mrb[0].mxu0
        %v261 = vpop.f32.mrb[0].mxu0
        %v262 = vadd.f32 %v219, %v261
        %v263 = vpop.f32.mrb[0].mxu0
        %264 = vdwg.mxu0
        %v265 = vtanh.pop %v259
        %v266 = vtanh.pop %v262
        %v267 = vld [vmem:[%s2 + $0x1] sm:$0x1]
        %v268 = vlaneseq
        %v269 = vshrl.u32 %v268, 7
        %v270 = vsub.s32 0, %v269
        %v271 = vrot.slane %v267, %v270
        %v272 = vmul.f32 %v265, %v271
        %v273 = vmul.f32 %v266, %v271
        %v274 = vsel %vm220, %v272, 0.0
        %275 = vadd.xlane.f32.xlu0 %v274
        %v276 = vpop.xlane.xlu0 %275
        %v277 = vsel %vm220, %v273, 0.0
        %278 = vadd.xlane.f32.xlu0 %v277
        %v279 = vpop.xlane.xlu0 %278
        %v282 = vlaneseq
        %v283 = vand.u32 %v282, 127
        %v284 = vlaneseq
        %v285 = vshrl.u32 %v284, 7
        %v286 = vsub.s32 %v283, %v285
        %v287 = vrot.slane %v276, %v286
        %v288 = vlaneseq
        %v289 = vshrl.u32 %v288, 7
        %v290 = vsub.s32 %v283, %v289
        %v291 = vrot.slane %v279, %v290
        %vm292 = vcmask 1041409
        %v293 = vsel %vm292, %v291, %v287
        %vm295 = vcmask 58368
        %v296 = vsel %vm295, %v293, -inf
        %297 = vmax.xlane.f32.xlu0 %v296
        %v298 = vpop.xlane.xlu0 %297
        %v300 = vlaneseq
        %v301 = vshrl.u32 %v300, 7
        %v302 = vsub.s32 0, %v301
        %v303 = vrot.slane %v298, %v302
        %v304 = vlaneseq
        %v305 = vshrl.u32 %v304, 7
        %v306 = vsub.s32 1, %v305
        %v307 = vrot.slane %v298, %v306
        %v310 = vsub.f32 %v276, %v303
        %v311 = vsub.f32 %v279, %v307
        %v312 = vmul.f32 %v310, 1.442695
        %v313 = vpow.pop %v312
        %v314 = vmul.f32 %v311, 1.442695
        %v315 = vpow.pop %v314
        %318 = vset.pattern.permute.xlu0 0
        %319 = vperm.xlu0 %318, %v313
        %v320 = vpop.permute.xlu0 %319
        %321 = vset.pattern.permute.xlu0 0
        %322 = vperm.xlu0 %321, %v315
        %v323 = vpop.permute.xlu0 %322
        %v324 = vlaneseq
        %v325 = vshrl.u32 %v324, 7
        %v326 = vsub.s32 %v283, %v325
        %v327 = vrot.slane %v320, %v326
        %v328 = vlaneseq
        %v329 = vshrl.u32 %v328, 7
        %v330 = vsub.s32 %v283, %v329
        %v331 = vrot.slane %v323, %v330
        %v332 = vsel %vm292, %v331, %v327
        %v334 = vsel %vm295, %v332, 0.0
        %335 = vadd.xlane.f32.xlu0 %v334
        %v336 = vpop.xlane.xlu0 %335
        %v337 = vrcp.pop %v336
        %v339 = vlaneseq
        %v340 = vshrl.u32 %v339, 7
        %v341 = vsub.s32 0, %v340
        %v342 = vrot.slane %v337, %v341
        %v343 = vlaneseq
        %v344 = vshrl.u32 %v343, 7
        %v345 = vsub.s32 1, %v344
        %v346 = vrot.slane %v337, %v345
        %v349 = vmul.f32 %v313, %v342
        %v350 = vmul.f32 %v315, %v346
        %352 = vset.pattern.permute.xlu0 0
        %353 = vperm.xlu0 %352, %v349
        %v354 = vpop.permute.xlu0 %353
        %357 = vset.pattern.permute.xlu0 0
        %358 = vperm.xlu0 %357, %v350
        %v359 = vpop.permute.xlu0 %358
        %v361 = vmul.f32 %v354, %v206
        %v362 = vmul.f32 %v359, %v207
        %v363 = vsel %vm220, %v361, 0.0
        %v364 = vrot.slane %v363, 4
        %v365 = vadd.f32 %v363, %v364
        %v366 = vrot.slane %v365, 2
        %v367 = vadd.f32 %v365, %v366
        %v368 = vrot.slane %v367, 1
        %v369 = vadd.f32 %v367, %v368
        %v370 = vsel %vm220, %v362, 0.0
        %v371 = vrot.slane %v370, 4
        %v372 = vadd.f32 %v370, %v371
        %v373 = vrot.slane %v372, 2
        %v374 = vadd.f32 %v372, %v373
        %v375 = vrot.slane %v374, 1
        %v376 = vadd.f32 %v374, %v375
        %v377 = vlaneseq
        %v378 = vshrl.u32 %v377, 7
        %v379 = vsub.s32 %v283, %v378
        %v380 = vrot.slane %v354, %v379
        %v381 = vlaneseq
        %v382 = vshrl.u32 %v381, 7
        %v383 = vsub.s32 %v283, %v382
        %v384 = vrot.slane %v359, %v383
        %v385 = vsel %vm292, %v384, %v380
        %387 = vst.msk [vmem:[%s204] sm:$0x3] %vm295, %v385
        %v390 = vsel %vm292, %v376, %v369
        %391 = vrot.lane.b32.xlu0 %v390, 8
        %v392 = vpop.permute.xlu0 %391
        %vm394 = vcmask 320576
        %395 = vst.msk [vmem:[%s204] sm:$0x3] %vm394, %v392
        %p396 = scmp.lt.s32.totalorder %s18, 1
        %s397 = scalar_select %p396, %s18, 1
        %s398 = smul.addr %s397, 2
        %s399 = scalar_lea.vmem %s3, %s398
        // Predicated region
        $region41: #{attention_forward.1} parent=31 // pred_check
          %p400 = pneg %p104
        $region42: #{attention_forward.1} parent=31 // pred_check_branch
          %402 = sbr.rel (%p400) target = $region44
        $region43: #{attention_forward.1} parent=31 // pred_region
          _
        $region44: #{attention_forward.1} parent=31 // pred_fallthru
          _
      $region32: #{attention_forward.1} parent=5 // pred_fallthru
        _
      %p403 = scmp.le.s32.totalorder 2, %s13
      // Predicated region
      $region45: #{attention_forward.1} parent=5 // pred_check
        %p404 = pneg %p403
      $region46: #{attention_forward.1} parent=5 // pred_check_branch
        %406 = sbr.rel (%p404) target = $region48
      $region47: #{attention_forward.1} parent=5 // pred_region
        %s407 = ssub.s32 %s13, 2
        // Predicated region
        $region49: #{attention_forward.1} parent=47 // pred_check
          %p408 = pneg %p110
        $region50: #{attention_forward.1} parent=47 // pred_check_branch
          %410 = sbr.rel (%p408) target = $region52
        $region51: #{attention_forward.1} parent=47 // pred_region
          %p411 = scmp.lt.s32.totalorder %s19, 1
          %s412 = scalar_select %p411, %s19, 1
          %s413 = smul.addr %s412, 2
          %s414 = scalar_lea.vmem %s3, %s413
        $region52: #{attention_forward.1} parent=47 // pred_fallthru
          _
      $region48: #{attention_forward.1} parent=5 // pred_fallthru
        _
    $region6: #{attention_forward.1} parent=1 // loop_footer
      %s17 = sadd.s32 1, %s13
    $region7: #{attention_forward.1} parent=1 // loop_footer_branch
      %12 = sbr.rel target = $region3
    $region8: #{attention_forward.1} parent=1 // loop_exit
      _
    %415 = vsyncpa [#allocation3], 1
    %s416 = scalar_lea.sflag [#allocation3], 1
    %417 = vsyncpa %s416, 1
    %418 = vsyncpa [#allocation5], 1

</llo_original>
